<compile_context>
chip_gen: v7x
topology: tpu7x:2x2x1
jax: 0.10.0
libtpu: 0.0.40
codegen_flags: <defaults>
</compile_context>

<pallas_src>
import jax
import jax.numpy as jnp
from jax.experimental import pallas as pl
from jax.experimental.pallas import tpu as pltpu


def decoder_kernel(x_ref, w1_ref, b1_ref, w2_ref, b2_ref, w3_ref, b3_ref, o_ref):
    # Layer 1: Linear(32 -> 64) + ReLU   (bf16 MXU inputs, f32 accumulation)
    h1 = jnp.dot(x_ref[...], w1_ref[...], preferred_element_type=jnp.float32)
    h1 = jnp.maximum(h1 + b1_ref[...], 0.0)
    # Layer 2: Linear(64 -> 128) + ReLU
    h2 = jnp.dot(h1.astype(w2_ref.dtype), w2_ref[...],
                 preferred_element_type=jnp.float32)
    h2 = jnp.maximum(h2 + b2_ref[...], 0.0)
    # Layer 3: Linear(128 -> 784) + Sigmoid
    h3 = jnp.dot(h2.astype(w3_ref.dtype), w3_ref[...],
                 preferred_element_type=jnp.float32)
    h3 = h3 + b3_ref[...]
    # Single-transcendental sigmoid in bf16: sigmoid(x) = 0.5*(tanh(0.5*x)+1).
    # bf16 packs 2 elems/lane through the EUP on v6e/v7x; on v5e it is
    # promoted to f32 (still one transcendental per element).
    h3b = h3.astype(jnp.bfloat16)
    o = 0.5 * (jnp.tanh(0.5 * h3b) + 1.0)
    o_ref[...] = o.astype(o_ref.dtype)


def _round_up(n, m):
    return ((n + m - 1) // m) * m


def _cdiv(a, b):
    return (a + b - 1) // b


def _choose_tiling(B, batch_tile):
    """Balanced batch tiles: padding < 16 rows, >=2 grid steps for v7x megacore."""
    n_steps = _cdiv(B, batch_tile)
    # Ensure >= 2 grid steps so ("parallel",) shards over v7x's 2 TensorCores.
    # Near-free on 1-TC v5e/v6e (per-step overhead ~0.35 us), so applied
    # unconditionally once the batch is non-trivial.
    if B >= 256:
        n_steps = max(n_steps, 2)
    tile = _round_up(_cdiv(B, n_steps), 16)  # multiple of 16: bf16 sublane packing
    B_pad = _round_up(B, tile)
    return tile, B_pad


def decoder_forward(x, params, *, batch_tile=2048, out_dtype=jnp.bfloat16):
    """x: [B, 32] float32 -> [B, 784] sigmoid outputs.

    out_dtype defaults to bf16 (halves the HBM writeback that bounds this
    kernel); pass jnp.float32 for exact original-module output dtype.
    """
    w1, b1, w2, b2, w3, b3 = params
    B, in_dim = x.shape
    out_dim = w3.shape[1]

    # bf16 activations/weights feed the MXU natively; biases stay f32.
    xb = x.astype(jnp.bfloat16)
    w1b, w2b, w3b = (w.astype(jnp.bfloat16) for w in (w1, w2, w3))
    b1f, b2f, b3f = (b.astype(jnp.float32) for b in (b1, b2, b3))

    tile, B_pad = _choose_tiling(B, batch_tile)
    if B_pad != B:
        xb = jnp.pad(xb, ((0, B_pad - B), (0, 0)))

    grid = (B_pad // tile,)

    in_specs = [
        pl.BlockSpec((tile, in_dim), lambda i: (i, 0)),   # x tile (pipelined)
        pl.BlockSpec(w1b.shape, lambda i: (0, 0)),        # W1 (VMEM-resident)
        pl.BlockSpec(b1f.shape, lambda i: (0, 0)),        # b1
        pl.BlockSpec(w2b.shape, lambda i: (0, 0)),        # W2
        pl.BlockSpec(b2f.shape, lambda i: (0, 0)),        # b2
        pl.BlockSpec(w3b.shape, lambda i: (0, 0)),        # W3
        pl.BlockSpec(b3f.shape, lambda i: (0, 0)),        # b3
    ]
    out_spec = pl.BlockSpec((tile, out_dim), lambda i: (i, 0))

    out_itemsize = jnp.dtype(out_dtype).itemsize
    flops = 2 * B_pad * (in_dim * 64 + 64 * 128 + 128 * out_dim)
    weight_bytes = sum(int(a.size) * a.dtype.itemsize
                       for a in (w1b, b1f, w2b, b2f, w3b, b3f))
    bytes_accessed = (B_pad * in_dim * 2            # bf16 input
                      + B_pad * out_dim * out_itemsize
                      + weight_bytes)
    cost = pl.CostEstimate(flops=flops,
                           transcendentals=B_pad * out_dim,  # one tanh / element
                           bytes_accessed=bytes_accessed)

    out = pl.pallas_call(
        decoder_kernel,
        out_shape=jax.ShapeDtypeStruct((B_pad, out_dim), out_dtype),
        grid_spec=pltpu.PrefetchScalarGridSpec(
            num_scalar_prefetch=0,
            grid=grid,
            in_specs=in_specs,
            out_specs=out_spec,
        ),
        compiler_params=pltpu.CompilerParams(
            dimension_semantics=("parallel",),
            # Explicit scoped-VMEM budget: covers f32 h3 / sigmoid temporaries
            # at tile=2048 (~22 MB total), above v5e's 16 MiB default and
            # below v7x's 64 MiB physical VMEM.
            vmem_limit_bytes=48 * 1024 * 1024,
        ),
        cost_estimate=cost,
    )(xb, w1b, b1f, w2b, b2f, w3b, b3f)

    if B_pad != B:
        out = out[:B]
    return out


def init_params(key):
    """Deterministic init mirroring nn.Linear shapes (stored as [in, out])."""
    dims = [(32, 64), (64, 128), (128, 28 * 28)]
    params = []
    for fan_in, fan_out in dims:
        kw, kb, key = jax.random.split(key, 3)
        bound = 1.0 / (fan_in ** 0.5)  # PyTorch default uniform(-1/sqrt(in), 1/sqrt(in))
        w = jax.random.uniform(kw, (fan_in, fan_out), jnp.float32, -bound, bound)
        b = jax.random.uniform(kb, (1, fan_out), jnp.float32, -bound, bound)
        params.extend([w, b])
    return tuple(params)


def decoder_reference_f32(x, params):
    w1, b1, w2, b2, w3, b3 = params
    h = jnp.maximum(x @ w1 + b1, 0.0)
    h = jnp.maximum(h @ w2 + b2, 0.0)
    return jax.nn.sigmoid(h @ w3 + b3)


def decoder_reference_bf16(x, params):
    """Mirrors the kernel's bf16-MXU-input / f32-accumulation path."""
    w1, b1, w2, b2, w3, b3 = params
    h = jnp.dot(x.astype(jnp.bfloat16), w1.astype(jnp.bfloat16),
                preferred_element_type=jnp.float32)
    h = jnp.maximum(h + b1, 0.0)
    h = jnp.dot(h.astype(jnp.bfloat16), w2.astype(jnp.bfloat16),
                preferred_element_type=jnp.float32)
    h = jnp.maximum(h + b2, 0.0)
    h = jnp.dot(h.astype(jnp.bfloat16), w3.astype(jnp.bfloat16),
                preferred_element_type=jnp.float32)
    return jax.nn.sigmoid(h + b3)


if __name__ == "__main__":
    key = jax.random.PRNGKey(0)
    kx, kp = jax.random.split(key)

    B = 8  # small demo batch; exercises the pad-to-tile (ragged) path
    x = jax.random.normal(kx, (B, 32), jnp.float32)
    params = init_params(kp)

    # Default fast path: bf16 output (halves the HBM writeback that bounds
    # this kernel). Also run the f32-output path for exact module dtype.
    out_bf16 = jax.block_until_ready(decoder_forward(x, params))
    assert out_bf16.shape == (B, 28 * 28), out_bf16.shape
    assert out_bf16.dtype == jnp.bfloat16, out_bf16.dtype

    out_f32 = jax.block_until_ready(
        decoder_forward(x, params, out_dtype=jnp.float32))
    assert out_f32.shape == (B, 28 * 28), out_f32.shape
    assert out_f32.dtype == jnp.float32, out_f32.dtype

    ref_bf16 = decoder_reference_bf16(x, params)
    ref_f32 = decoder_reference_f32(x, params)
    for out in (out_bf16.astype(jnp.float32), out_f32):
        # Close to a reference using the same bf16 matmul inputs (residual
        # error = bf16 h3 rounding + tanh-form sigmoid + bf16 output cast) ...
        assert jnp.allclose(out, ref_bf16, atol=2e-2, rtol=2e-2), \
            "mismatch vs bf16 reference"
        # ... and within mixed-precision rounding of the pure-f32 reference
        # (sigmoid outputs are in [0,1]).
        assert jnp.allclose(out, ref_f32, atol=5e-2, rtol=5e-2), \
            "mismatch vs f32 reference"

    print("KERNEL_OK")
</pallas_src>

<mosaic_0001>
module attributes {stable_mosaic.version = 11 : i64} {
  func.func @decoder_kernel(%arg0: i32, %arg1: memref<16x32xbf16, #tpu.memory_space<vmem>>, %arg2: memref<32x64xbf16, #tpu.memory_space<vmem>>, %arg3: memref<1x64xf32, #tpu.memory_space<vmem>>, %arg4: memref<64x128xbf16, #tpu.memory_space<vmem>>, %arg5: memref<1x128xf32, #tpu.memory_space<vmem>>, %arg6: memref<128x784xbf16, #tpu.memory_space<vmem>>, %arg7: memref<1x784xf32, #tpu.memory_space<vmem>>, %arg8: memref<16x784xbf16, #tpu.memory_space<vmem>>) attributes {dimension_semantics = [#tpu.dimension_semantics<parallel>], iteration_bounds = array<i64: 1>, scalar_prefetch = 0 : i64, scratch_operands = 0 : i64, tpu.core_type = #tpu.core_type<tc>, window_params = [{transform_indices = @transform_0, window_bounds = array<i64: 16, 32>}, {pipeline_mode = #tpu.pipeline_mode<synchronous>, transform_indices = @transform_1, window_bounds = array<i64: 32, 64>}, {pipeline_mode = #tpu.pipeline_mode<synchronous>, transform_indices = @transform_2, window_bounds = array<i64: 1, 64>}, {pipeline_mode = #tpu.pipeline_mode<synchronous>, transform_indices = @transform_3, window_bounds = array<i64: 64, 128>}, {pipeline_mode = #tpu.pipeline_mode<synchronous>, transform_indices = @transform_4, window_bounds = array<i64: 1, 128>}, {pipeline_mode = #tpu.pipeline_mode<synchronous>, transform_indices = @transform_5, window_bounds = array<i64: 128, 784>}, {pipeline_mode = #tpu.pipeline_mode<synchronous>, transform_indices = @transform_6, window_bounds = array<i64: 1, 784>}, {transform_indices = @transform_7, window_bounds = array<i64: 16, 784>}]} {
    %c0 = arith.constant 0 : index
    %c0_0 = arith.constant 0 : index
    %0 = vector.load %arg1[%c0, %c0_0] : memref<16x32xbf16, #tpu.memory_space<vmem>>, vector<16x32xbf16>
    %c0_1 = arith.constant 0 : index
    %c0_2 = arith.constant 0 : index
    %1 = vector.load %arg2[%c0_1, %c0_2] : memref<32x64xbf16, #tpu.memory_space<vmem>>, vector<32x64xbf16>
    %cst = arith.constant dense<0.000000e+00> : vector<16x64xf32>
    %2 = tpu.matmul %0, %1, %cst {dimension_numbers = #tpu.dot_dimension_numbers<[1], [0], [0], [1], [0, 0, 1, 1], [], []>} : vector<16x32xbf16>, vector<32x64xbf16>, vector<16x64xf32> -> vector<16x64xf32>
    %c0_3 = arith.constant 0 : index
    %c0_4 = arith.constant 0 : index
    %3 = vector.load %arg3[%c0_3, %c0_4] : memref<1x64xf32, #tpu.memory_space<vmem>>, vector<1x64xf32>
    %4 = vector.broadcast %3 : vector<1x64xf32> to vector<16x64xf32>
    %5 = arith.addf %2, %4 : vector<16x64xf32>
    %cst_5 = arith.constant 0.000000e+00 : f32
    %6 = vector.broadcast %cst_5 : f32 to vector<16x64xf32>
    %7 = arith.maximumf %5, %6 : vector<16x64xf32>
    %8 = arith.truncf %7 : vector<16x64xf32> to vector<16x64xbf16>
    %c0_6 = arith.constant 0 : index
    %c0_7 = arith.constant 0 : index
    %9 = vector.load %arg4[%c0_6, %c0_7] : memref<64x128xbf16, #tpu.memory_space<vmem>>, vector<64x128xbf16>
    %cst_8 = arith.constant dense<0.000000e+00> : vector<16x128xf32>
    %10 = tpu.matmul %8, %9, %cst_8 {dimension_numbers = #tpu.dot_dimension_numbers<[1], [0], [0], [1], [0, 0, 1, 1], [], []>} : vector<16x64xbf16>, vector<64x128xbf16>, vector<16x128xf32> -> vector<16x128xf32>
    %c0_9 = arith.constant 0 : index
    %c0_10 = arith.constant 0 : index
    %11 = vector.load %arg5[%c0_9, %c0_10] : memref<1x128xf32, #tpu.memory_space<vmem>>, vector<1x128xf32>
    %12 = vector.broadcast %11 : vector<1x128xf32> to vector<16x128xf32>
    %13 = arith.addf %10, %12 : vector<16x128xf32>
    %cst_11 = arith.constant 0.000000e+00 : f32
    %14 = vector.broadcast %cst_11 : f32 to vector<16x128xf32>
    %15 = arith.maximumf %13, %14 : vector<16x128xf32>
    %16 = arith.truncf %15 : vector<16x128xf32> to vector<16x128xbf16>
    %c0_12 = arith.constant 0 : index
    %c0_13 = arith.constant 0 : index
    %17 = vector.load %arg6[%c0_12, %c0_13] : memref<128x784xbf16, #tpu.memory_space<vmem>>, vector<128x784xbf16>
    %cst_14 = arith.constant dense<0.000000e+00> : vector<16x784xf32>
    %18 = tpu.matmul %16, %17, %cst_14 {dimension_numbers = #tpu.dot_dimension_numbers<[1], [0], [0], [1], [0, 0, 1, 1], [], []>} : vector<16x128xbf16>, vector<128x784xbf16>, vector<16x784xf32> -> vector<16x784xf32>
    %c0_15 = arith.constant 0 : index
    %c0_16 = arith.constant 0 : index
    %19 = vector.load %arg7[%c0_15, %c0_16] : memref<1x784xf32, #tpu.memory_space<vmem>>, vector<1x784xf32>
    %20 = vector.broadcast %19 : vector<1x784xf32> to vector<16x784xf32>
    %21 = arith.addf %18, %20 : vector<16x784xf32>
    %22 = arith.truncf %21 : vector<16x784xf32> to vector<16x784xbf16>
    %cst_17 = arith.constant 5.000000e-01 : bf16
    %23 = vector.broadcast %cst_17 : bf16 to vector<16x784xbf16>
    %24 = arith.mulf %23, %22 : vector<16x784xbf16>
    %25 = math.tanh %24 : vector<16x784xbf16>
    %cst_18 = arith.constant 1.000000e+00 : bf16
    %26 = vector.broadcast %cst_18 : bf16 to vector<16x784xbf16>
    %27 = arith.addf %25, %26 : vector<16x784xbf16>
    %cst_19 = arith.constant 5.000000e-01 : bf16
    %28 = vector.broadcast %cst_19 : bf16 to vector<16x784xbf16>
    %29 = arith.mulf %28, %27 : vector<16x784xbf16>
    %c0_20 = arith.constant 0 : index
    %c0_21 = arith.constant 0 : index
    %30 = vector.load %arg8[%c0_20, %c0_21] : memref<16x784xbf16, #tpu.memory_space<vmem>>, vector<16x784xbf16>
    tpu.vector_store %arg8[%c0_20, %c0_21], %29 {strides = array<i32>} : memref<16x784xbf16, #tpu.memory_space<vmem>>, vector<16x784xbf16>,
    return
  }
  func.func @transform_0(%arg0: i32) -> (i32, i32) {
    %c0_i32 = arith.constant 0 : i32
    %c0_i32_0 = arith.constant 0 : i32
    return %arg0, %c0_i32 : i32, i32
  }
  func.func @transform_1(%arg0: i32) -> (i32, i32) {
    %c0_i32 = arith.constant 0 : i32
    %c0_i32_0 = arith.constant 0 : i32
    %c0_i32_1 = arith.constant 0 : i32
    return %c0_i32, %c0_i32_0 : i32, i32
  }
  func.func @transform_2(%arg0: i32) -> (i32, i32) {
    %c0_i32 = arith.constant 0 : i32
    %c0_i32_0 = arith.constant 0 : i32
    %c0_i32_1 = arith.constant 0 : i32
    return %c0_i32, %c0_i32_0 : i32, i32
  }
  func.func @transform_3(%arg0: i32) -> (i32, i32) {
    %c0_i32 = arith.constant 0 : i32
    %c0_i32_0 = arith.constant 0 : i32
    %c0_i32_1 = arith.constant 0 : i32
    return %c0_i32, %c0_i32_0 : i32, i32
  }
  func.func @transform_4(%arg0: i32) -> (i32, i32) {
    %c0_i32 = arith.constant 0 : i32
    %c0_i32_0 = arith.constant 0 : i32
    %c0_i32_1 = arith.constant 0 : i32
    return %c0_i32, %c0_i32_0 : i32, i32
  }
  func.func @transform_5(%arg0: i32) -> (i32, i32) {
    %c0_i32 = arith.constant 0 : i32
    %c0_i32_0 = arith.constant 0 : i32
    %c0_i32_1 = arith.constant 0 : i32
    return %c0_i32, %c0_i32_0 : i32, i32
  }
  func.func @transform_6(%arg0: i32) -> (i32, i32) {
    %c0_i32 = arith.constant 0 : i32
    %c0_i32_0 = arith.constant 0 : i32
    %c0_i32_1 = arith.constant 0 : i32
    return %c0_i32, %c0_i32_0 : i32, i32
  }
  func.func @transform_7(%arg0: i32) -> (i32, i32) {
    %c0_i32 = arith.constant 0 : i32
    %c0_i32_0 = arith.constant 0 : i32
    return %arg0, %c0_i32 : i32, i32
  }
}

</mosaic_0001>

<llo_original>
// kernel: tpu_custom_call.1
$region0: #{tpu_custom_call.1}
  #allocation0 [shape = 'u32[]', space=smem, size = 0x4, offset = 0x4, fixed_abs, tag = 'smem constant byte address 0x4 - core index']
  #allocation1 [shape = 'u32[144,128]{1,0:T(1,128)}', space=vmem, size = 0x12000, scoped, tag = 'internal scratch']
  %s0 = inlined_call_operand.vmem [shape: bf16[16,32], index: 0, kind: input, shape index: {}]
  %s1 = inlined_call_operand.vmem [shape: bf16[32,64], index: 1, kind: input, shape index: {}]
  %s2 = inlined_call_operand.vmem [shape: f32[1,64], index: 2, kind: input, shape index: {}]
  %s3 = inlined_call_operand.vmem [shape: bf16[64,128], index: 3, kind: input, shape index: {}]
  %s4 = inlined_call_operand.vmem [shape: f32[1,128], index: 4, kind: input, shape index: {}]
  %s5 = inlined_call_operand.vmem [shape: bf16[128,784], index: 5, kind: input, shape index: {}]
  %s6 = inlined_call_operand.vmem [shape: f32[1,784], index: 6, kind: input, shape index: {}]
  %s7 = inlined_call_operand.hbm [shape: bf16[16,784], index: 7, kind: output, shape index: {}]
  %s8 = sld [smem:[#allocation0]]
  $region38: #{tpu_custom_call.1} parent=0
    _
  %s10 = ssub.s32 1, %s8
  %s11 = scalar_select 0, %s10, %s8
  $region1: #{tpu_custom_call.1} parent=0
    #allocation2 [shape = 'u8[28672]{0}', space=vmem, size = 0x7000, scoped, tag = 'output window, operand 0, single buffered']
    #allocation3 [shape = 's32[1]{0}', space=sflag, size = 0x4, scoped, tag = 'scoped memory for tpu_custom_call.1']
    %12 = vsyncpa [#allocation3], 0
    // Predicated region
    $region2: #{tpu_custom_call.1} parent=1 // pred_check
      _
    $region3: #{tpu_custom_call.1} parent=1 // pred_check_branch
      %14 = sbr.rel (0) target = $region5
    $region4: #{tpu_custom_call.1} parent=1 // pred_region
      _
    $region5: #{tpu_custom_call.1} parent=1 // pred_fallthru
      _
    // Predicated region
    $region6: #{tpu_custom_call.1} parent=1 // pred_check
      _
    $region7: #{tpu_custom_call.1} parent=1 // pred_check_branch
      %16 = sbr.rel (0) target = $region9
    $region8: #{tpu_custom_call.1} parent=1 // pred_region
      _
    $region9: #{tpu_custom_call.1} parent=1 // pred_fallthru
      _
    // Predicated region
    $region10: #{tpu_custom_call.1} parent=1 // pred_check
      _
    $region11: #{tpu_custom_call.1} parent=1 // pred_check_branch
      %18 = sbr.rel (0) target = $region13
    $region12: #{tpu_custom_call.1} parent=1 // pred_region
      _
    $region13: #{tpu_custom_call.1} parent=1 // pred_fallthru
      _
    // Predicated region
    $region14: #{tpu_custom_call.1} parent=1 // pred_check
      _
    $region15: #{tpu_custom_call.1} parent=1 // pred_check_branch
      %20 = sbr.rel (0) target = $region17
    $region16: #{tpu_custom_call.1} parent=1 // pred_region
      _
    $region17: #{tpu_custom_call.1} parent=1 // pred_fallthru
      _
    // Predicated region
    $region18: #{tpu_custom_call.1} parent=1 // pred_check
      _
    $region19: #{tpu_custom_call.1} parent=1 // pred_check_branch
      %22 = sbr.rel (0) target = $region21
    $region20: #{tpu_custom_call.1} parent=1 // pred_region
      _
    $region21: #{tpu_custom_call.1} parent=1 // pred_fallthru
      _
    // Predicated region
    $region22: #{tpu_custom_call.1} parent=1 // pred_check
      _
    $region23: #{tpu_custom_call.1} parent=1 // pred_check_branch
      %24 = sbr.rel (0) target = $region25
    $region24: #{tpu_custom_call.1} parent=1 // pred_region
      _
    $region25: #{tpu_custom_call.1} parent=1 // pred_fallthru
      _
    // Predicated region
    $region26: #{tpu_custom_call.1} parent=1 // pred_check
      _
    $region27: #{tpu_custom_call.1} parent=1 // pred_check_branch
      %26 = sbr.rel (0) target = $region29
    $region28: #{tpu_custom_call.1} parent=1 // pred_region
      _
    $region29: #{tpu_custom_call.1} parent=1 // pred_fallthru
      _
    %v30 = vld [vmem:[%s0] sm:$0xf]
    %v31 = vld [vmem:[%s0 + $0x4] sm:$0xf]
    %v32 = vld [vmem:[%s1] sm:$0xf]
    %v33 = vld [vmem:[%s1 + $0x4] sm:$0xf]
    %v34 = vld [vmem:[%s1 + $0x8] sm:$0xf]
    %v35 = vld [vmem:[%s1 + $0xc] sm:$0xf]
    %v36 = vld [vmem:[%s2] sm:$0x1]
    %v38 = vlaneseq
    %v39 = vshrl.u32 %v38, 7
    %v40 = vsub.s32 0, %v39
    %v41 = vrot.slane %v36, %v40
    %v45 = vunpack.c.l.b16 %v30
    %v46 = vunpack.c.l.b16 %v31
    %v47 = vpack.c.b16 %v46, %v45
    %v52 = vunpack.c.l.b16 %v32
    %v53 = vunpack.c.l.b16 %v33
    %v54 = vunpack.c.l.b16 %v34
    %v55 = vunpack.c.l.b16 %v35
    %v56 = vpack.c.b16 %v53, %v52
    %v57 = vpack.c.b16 %v55, %v54
    %vm60 = vcmask 261120
    %v62 = vsel %vm60, %v47, 0
    %64 = vmatprep.subr.bf16.mxu0 0
    %65 = vmatpush1.bf16.msra.mxu0 %v56
    %66 = vmatprep.subr.bf16.mxu0 0
    %67 = vmatpush1.bf16.msra.mxu0 %v57
    %68 = vmatprep.subr.bf16.mxu0 0
    %69 = vmatpush1.bf16.msra.mxu0 0
    %70 = vmatprep.subr.bf16.mxu0 0
    %71 = vmatpush1.bf16.msra.mxu0 0
    %72 = vmatprep.subr.bf16.mxu0 0
    %73 = vmatpush1.bf16.msra.mxu0 0
    %74 = vmatprep.subr.bf16.mxu0 0
    %75 = vmatpush1.bf16.msra.mxu0 0
    %76 = vmatprep.subr.bf16.mxu0 0
    %77 = vmatpush1.bf16.msra.mxu0 0
    %78 = vmatprep.subr.bf16.mxu0 0
    %79 = vmatpush1.bf16.msra.mxu0 0
    %80 = vmatprep.subr.bf16.mxu0 0
    %81 = vmatpush1.bf16.msra.mxu0 0
    %82 = vmatprep.subr.bf16.mxu0 0
    %83 = vmatpush1.bf16.msra.mxu0 0
    %84 = vmatprep.subr.bf16.mxu0 0
    %85 = vmatpush1.bf16.msra.mxu0 0
    %86 = vmatprep.subr.bf16.mxu0 0
    %87 = vmatpush1.bf16.msra.mxu0 0
    %88 = vmatprep.subr.bf16.mxu0 0
    %89 = vmatpush1.bf16.msra.mxu0 0
    %90 = vmatprep.subr.bf16.mxu0 0
    %91 = vmatpush1.bf16.msra.mxu0 0
    %92 = vmatprep.subr.bf16.mxu0 0
    %93 = vmatpush1.bf16.msra.mxu0 0
    %94 = vmatprep.subr.bf16.mxu0 0
    %95 = vmatpush1.bf16.msra.mxu0 0
    %96 = vmatprep.mubr.bf16.mxu0 0
    %97 = vmatmul.mubr.bf16.gmra.mrb[0].mxu0 %v62
    %v98 = vpop.f32.mrb[0].mxu0
    %v99 = vadd.f32 %v41, %v98
    %v100 = vpop.f32.mrb[0].mxu0
    %v101 = vpop.f32.mrb[0].mxu0
    %v102 = vadd.f32 %v41, %v101
    %v103 = vpop.f32.mrb[0].mxu0
    %104 = vdwg.mxu0
    %v105 = vmax.f32 %v99, 0.0
    %v106 = vmax.f32 %v102, 0.0
    %v107 = vpack.c.bf16 %v106, %v105
    %v108 = vld [vmem:[%s3] sm:$0xf]
    %v109 = vld [vmem:[%s3 + $0x4] sm:$0xf]
    %v110 = vld [vmem:[%s3 + $0x8] sm:$0xf]
    %v111 = vld [vmem:[%s3 + $0xc] sm:$0xf]
    %v112 = vld [vmem:[%s3 + $0x10] sm:$0xf]
    %v113 = vld [vmem:[%s3 + $0x14] sm:$0xf]
    %v114 = vld [vmem:[%s3 + $0x18] sm:$0xf]
    %v115 = vld [vmem:[%s3 + $0x1c] sm:$0xf]
    %v116 = vld [vmem:[%s4] sm:$0x1]
    %v118 = vlaneseq
    %v119 = vshrl.u32 %v118, 7
    %v120 = vsub.s32 0, %v119
    %v121 = vrot.slane %v116, %v120
    %v131 = vunpack.c.l.b16 %v108
    %v132 = vunpack.c.l.b16 %v109
    %v133 = vunpack.c.l.b16 %v110
    %v134 = vunpack.c.l.b16 %v111
    %v135 = vunpack.c.l.b16 %v112
    %v136 = vunpack.c.l.b16 %v113
    %v137 = vunpack.c.l.b16 %v114
    %v138 = vunpack.c.l.b16 %v115
    %v139 = vpack.c.b16 %v132, %v131
    %v140 = vpack.c.b16 %v134, %v133
    %v141 = vpack.c.b16 %v136, %v135
    %v142 = vpack.c.b16 %v138, %v137
    %vm147 = vcmask 523264
    %v149 = vsel %vm147, %v107, 0
    %151 = vmatprep.subr.bf16.mxu0 0
    %152 = vmatpush1.bf16.msra.mxu0 %v139
    %153 = vmatprep.subr.bf16.mxu0 0
    %154 = vmatpush1.bf16.msra.mxu0 %v140
    %155 = vmatprep.subr.bf16.mxu0 0
    %156 = vmatpush1.bf16.msra.mxu0 %v141
    %157 = vmatprep.subr.bf16.mxu0 0
    %158 = vmatpush1.bf16.msra.mxu0 %v142
    %159 = vmatprep.subr.bf16.mxu0 0
    %160 = vmatpush1.bf16.msra.mxu0 0
    %161 = vmatprep.subr.bf16.mxu0 0
    %162 = vmatpush1.bf16.msra.mxu0 0
    %163 = vmatprep.subr.bf16.mxu0 0
    %164 = vmatpush1.bf16.msra.mxu0 0
    %165 = vmatprep.subr.bf16.mxu0 0
    %166 = vmatpush1.bf16.msra.mxu0 0
    %167 = vmatprep.subr.bf16.mxu0 0
    %168 = vmatpush1.bf16.msra.mxu0 0
    %169 = vmatprep.subr.bf16.mxu0 0
    %170 = vmatpush1.bf16.msra.mxu0 0
    %171 = vmatprep.subr.bf16.mxu0 0
    %172 = vmatpush1.bf16.msra.mxu0 0
    %173 = vmatprep.subr.bf16.mxu0 0
    %174 = vmatpush1.bf16.msra.mxu0 0
    %175 = vmatprep.subr.bf16.mxu0 0
    %176 = vmatpush1.bf16.msra.mxu0 0
    %177 = vmatprep.subr.bf16.mxu0 0
    %178 = vmatpush1.bf16.msra.mxu0 0
    %179 = vmatprep.subr.bf16.mxu0 0
    %180 = vmatpush1.bf16.msra.mxu0 0
    %181 = vmatprep.subr.bf16.mxu0 0
    %182 = vmatpush1.bf16.msra.mxu0 0
    %183 = vmatprep.mubr.bf16.mxu0 0
    %184 = vmatmul.mubr.bf16.gmra.mrb[0].mxu0 %v149
    %v185 = vpop.f32.mrb[0].mxu0
    %v186 = vadd.f32 %v121, %v185
    %v187 = vpop.f32.mrb[0].mxu0
    %v188 = vpop.f32.mrb[0].mxu0
    %v189 = vadd.f32 %v121, %v188
    %v190 = vpop.f32.mrb[0].mxu0
    %191 = vdwg.mxu0
    %v192 = vmax.f32 %v186, 0.0
    %v193 = vmax.f32 %v189, 0.0
    %v194 = vpack.c.bf16 %v193, %v192
    %v195 = vld [vmem:[%s5] sm:$0xff]
    %v196 = vld [vmem:[%s5 + $0x8] sm:$0xff]
    %v197 = vld [vmem:[%s5 + $0x10] sm:$0xff]
    %v198 = vld [vmem:[%s5 + $0x18] sm:$0xf]
    %v199 = vld [vmem:[%s5 + $0x1c] sm:$0xff]
    %v200 = vld [vmem:[%s5 + $0x24] sm:$0xff]
    %v201 = vld [vmem:[%s5 + $0x2c] sm:$0xff]
    %v202 = vld [vmem:[%s5 + $0x34] sm:$0xf]
    %v203 = vld [vmem:[%s5 + $0x38] sm:$0xff]
    %v204 = vld [vmem:[%s5 + $0x40] sm:$0xff]
    %v205 = vld [vmem:[%s5 + $0x48] sm:$0xff]
    %v206 = vld [vmem:[%s5 + $0x50] sm:$0xf]
    %v207 = vld [vmem:[%s5 + $0x54] sm:$0xff]
    %v208 = vld [vmem:[%s5 + $0x5c] sm:$0xff]
    %v209 = vld [vmem:[%s5 + $0x64] sm:$0xff]
    %v210 = vld [vmem:[%s5 + $0x6c] sm:$0xf]
    %v211 = vld [vmem:[%s5 + $0x70] sm:$0xff]
    %v212 = vld [vmem:[%s5 + $0x78] sm:$0xff]
    %v213 = vld [vmem:[%s5 + $0x80] sm:$0xff]
    %v214 = vld [vmem:[%s5 + $0x88] sm:$0xf]
    %v215 = vld [vmem:[%s5 + $0x8c] sm:$0xff]
    %v216 = vld [vmem:[%s5 + $0x94] sm:$0xff]
    %v217 = vld [vmem:[%s5 + $0x9c] sm:$0xff]
    %v218 = vld [vmem:[%s5 + $0xa4] sm:$0xf]
    %v219 = vld [vmem:[%s5 + $0xa8] sm:$0xff]
    %v220 = vld [vmem:[%s5 + $0xb0] sm:$0xff]
    %v221 = vld [vmem:[%s5 + $0xb8] sm:$0xff]
    %v222 = vld [vmem:[%s5 + $0xc0] sm:$0xf]
    %v223 = vld [vmem:[%s5 + $0xc4] sm:$0xff]
    %v224 = vld [vmem:[%s5 + $0xcc] sm:$0xff]
    %v225 = vld [vmem:[%s5 + $0xd4] sm:$0xff]
    %v226 = vld [vmem:[%s5 + $0xdc] sm:$0xf]
    %v227 = vld [vmem:[%s5 + $0xe0] sm:$0xff]
    %v228 = vld [vmem:[%s5 + $0xe8] sm:$0xff]
    %v229 = vld [vmem:[%s5 + $0xf0] sm:$0xff]
    %v230 = vld [vmem:[%s5 + $0xf8] sm:$0xf]
    %v231 = vld [vmem:[%s5 + $0xfc] sm:$0xff]
    %v232 = vld [vmem:[%s5 + $0x104] sm:$0xff]
    %v233 = vld [vmem:[%s5 + $0x10c] sm:$0xff]
    %v234 = vld [vmem:[%s5 + $0x114] sm:$0xf]
    %v235 = vld [vmem:[%s5 + $0x118] sm:$0xff]
    %v236 = vld [vmem:[%s5 + $0x120] sm:$0xff]
    %v237 = vld [vmem:[%s5 + $0x128] sm:$0xff]
    %v238 = vld [vmem:[%s5 + $0x130] sm:$0xf]
    %v239 = vld [vmem:[%s5 + $0x134] sm:$0xff]
    %v240 = vld [vmem:[%s5 + $0x13c] sm:$0xff]
    %v241 = vld [vmem:[%s5 + $0x144] sm:$0xff]
    %v242 = vld [vmem:[%s5 + $0x14c] sm:$0xf]
    %v243 = vld [vmem:[%s5 + $0x150] sm:$0xff]
    %v244 = vld [vmem:[%s5 + $0x158] sm:$0xff]
    %v245 = vld [vmem:[%s5 + $0x160] sm:$0xff]
    %v246 = vld [vmem:[%s5 + $0x168] sm:$0xf]
    %v247 = vld [vmem:[%s5 + $0x16c] sm:$0xff]
    %v248 = vld [vmem:[%s5 + $0x174] sm:$0xff]
    %v249 = vld [vmem:[%s5 + $0x17c] sm:$0xff]
    %v250 = vld [vmem:[%s5 + $0x184] sm:$0xf]
    %v251 = vld [vmem:[%s5 + $0x188] sm:$0xff]
    %v252 = vld [vmem:[%s5 + $0x190] sm:$0xff]
    %v253 = vld [vmem:[%s5 + $0x198] sm:$0xff]
    %v254 = vld [vmem:[%s5 + $0x1a0] sm:$0xf]
    %v255 = vld [vmem:[%s5 + $0x1a4] sm:$0xff]
    %v256 = vld [vmem:[%s5 + $0x1ac] sm:$0xff]
    %v257 = vld [vmem:[%s5 + $0x1b4] sm:$0xff]
    %v258 = vld [vmem:[%s5 + $0x1bc] sm:$0xf]
    %v259 = vld [vmem:[%s6] sm:$0x7f]
    %v261 = vlaneseq
    %v262 = vshrl.u32 %v261, 7
    %v263 = vsub.s32 0, %v262
    %v264 = vrot.slane %v259, %v263
    %v265 = vlaneseq
    %v266 = vshrl.u32 %v265, 7
    %v267 = vsub.s32 1, %v266
    %v268 = vrot.slane %v259, %v267
    %v269 = vlaneseq
    %v270 = vshrl.u32 %v269, 7
    %v271 = vsub.s32 2, %v270
    %v272 = vrot.slane %v259, %v271
    %v273 = vlaneseq
    %v274 = vshrl.u32 %v273, 7
    %v275 = vsub.s32 3, %v274
    %v276 = vrot.slane %v259, %v275
    %v277 = vlaneseq
    %v278 = vshrl.u32 %v277, 7
    %v279 = vsub.s32 4, %v278
    %v280 = vrot.slane %v259, %v279
    %v281 = vlaneseq
    %v282 = vshrl.u32 %v281, 7
    %v283 = vsub.s32 5, %v282
    %v284 = vrot.slane %v259, %v283
    %v285 = vlaneseq
    %v286 = vshrl.u32 %v285, 7
    %v287 = vsub.s32 6, %v286
    %v288 = vrot.slane %v259, %v287
    %v360 = vunpack.c.l.b16 %v195
    %v361 = vunpack.c.h.b16 %v195
    %v362 = vunpack.c.l.b16 %v196
    %v363 = vunpack.c.h.b16 %v196
    %v364 = vunpack.c.l.b16 %v197
    %v365 = vunpack.c.h.b16 %v197
    %v366 = vunpack.c.l.b16 %v198
    %v367 = vunpack.c.l.b16 %v199
    %v368 = vunpack.c.h.b16 %v199
    %v369 = vunpack.c.l.b16 %v200
    %v370 = vunpack.c.h.b16 %v200
    %v371 = vunpack.c.l.b16 %v201
    %v372 = vunpack.c.h.b16 %v201
    %v373 = vunpack.c.l.b16 %v202
    %v374 = vunpack.c.l.b16 %v203
    %v375 = vunpack.c.h.b16 %v203
    %v376 = vunpack.c.l.b16 %v204
    %v377 = vunpack.c.h.b16 %v204
    %v378 = vunpack.c.l.b16 %v205
    %v379 = vunpack.c.h.b16 %v205
    %v380 = vunpack.c.l.b16 %v206
    %v381 = vunpack.c.l.b16 %v207
    %v382 = vunpack.c.h.b16 %v207
    %v383 = vunpack.c.l.b16 %v208
    %v384 = vunpack.c.h.b16 %v208
    %v385 = vunpack.c.l.b16 %v209
    %v386 = vunpack.c.h.b16 %v209
    %v387 = vunpack.c.l.b16 %v210
    %v388 = vunpack.c.l.b16 %v211
    %v389 = vunpack.c.h.b16 %v211
    %v390 = vunpack.c.l.b16 %v212
    %v391 = vunpack.c.h.b16 %v212
    %v392 = vunpack.c.l.b16 %v213
    %v393 = vunpack.c.h.b16 %v213
    %v394 = vunpack.c.l.b16 %v214
    %v395 = vunpack.c.l.b16 %v215
    %v396 = vunpack.c.h.b16 %v215
    %v397 = vunpack.c.l.b16 %v216
    %v398 = vunpack.c.h.b16 %v216
    %v399 = vunpack.c.l.b16 %v217
    %v400 = vunpack.c.h.b16 %v217
    %v401 = vunpack.c.l.b16 %v218
    %v402 = vunpack.c.l.b16 %v219
    %v403 = vunpack.c.h.b16 %v219
    %v404 = vunpack.c.l.b16 %v220
    %v405 = vunpack.c.h.b16 %v220
    %v406 = vunpack.c.l.b16 %v221
    %v407 = vunpack.c.h.b16 %v221
    %v408 = vunpack.c.l.b16 %v222
    %v409 = vunpack.c.l.b16 %v223
    %v410 = vunpack.c.h.b16 %v223
    %v411 = vunpack.c.l.b16 %v224
    %v412 = vunpack.c.h.b16 %v224
    %v413 = vunpack.c.l.b16 %v225
    %v414 = vunpack.c.h.b16 %v225
    %v415 = vunpack.c.l.b16 %v226
    %v416 = vunpack.c.l.b16 %v227
    %v417 = vunpack.c.h.b16 %v227
    %v418 = vunpack.c.l.b16 %v228
    %v419 = vunpack.c.h.b16 %v228
    %v420 = vunpack.c.l.b16 %v229
    %v421 = vunpack.c.h.b16 %v229
    %v422 = vunpack.c.l.b16 %v230
    %v423 = vunpack.c.l.b16 %v231
    %v424 = vunpack.c.h.b16 %v231
    %v425 = vunpack.c.l.b16 %v232
    %v426 = vunpack.c.h.b16 %v232
    %v427 = vunpack.c.l.b16 %v233
    %v428 = vunpack.c.h.b16 %v233
    %v429 = vunpack.c.l.b16 %v234
    %v430 = vunpack.c.l.b16 %v235
    %v431 = vunpack.c.h.b16 %v235
    %v432 = vunpack.c.l.b16 %v236
    %v433 = vunpack.c.h.b16 %v236
    %v434 = vunpack.c.l.b16 %v237
    %v435 = vunpack.c.h.b16 %v237
    %v436 = vunpack.c.l.b16 %v238
    %v437 = vunpack.c.l.b16 %v239
    %v438 = vunpack.c.h.b16 %v239
    %v439 = vunpack.c.l.b16 %v240
    %v440 = vunpack.c.h.b16 %v240
    %v441 = vunpack.c.l.b16 %v241
    %v442 = vunpack.c.h.b16 %v241
    %v443 = vunpack.c.l.b16 %v242
    %v444 = vunpack.c.l.b16 %v243
    %v445 = vunpack.c.h.b16 %v243
    %v446 = vunpack.c.l.b16 %v244
    %v447 = vunpack.c.h.b16 %v244
    %v448 = vunpack.c.l.b16 %v245
    %v449 = vunpack.c.h.b16 %v245
    %v450 = vunpack.c.l.b16 %v246
    %v451 = vunpack.c.l.b16 %v247
    %v452 = vunpack.c.h.b16 %v247
    %v453 = vunpack.c.l.b16 %v248
    %v454 = vunpack.c.h.b16 %v248
    %v455 = vunpack.c.l.b16 %v249
    %v456 = vunpack.c.h.b16 %v249
    %v457 = vunpack.c.l.b16 %v250
    %v458 = vunpack.c.l.b16 %v251
    %v459 = vunpack.c.h.b16 %v251
    %v460 = vunpack.c.l.b16 %v252
    %v461 = vunpack.c.h.b16 %v252
    %v462 = vunpack.c.l.b16 %v253
    %v463 = vunpack.c.h.b16 %v253
    %v464 = vunpack.c.l.b16 %v254
    %v465 = vunpack.c.l.b16 %v255
    %v466 = vunpack.c.h.b16 %v255
    %v467 = vunpack.c.l.b16 %v256
    %v468 = vunpack.c.h.b16 %v256
    %v469 = vunpack.c.l.b16 %v257
    %v470 = vunpack.c.h.b16 %v257
    %v471 = vunpack.c.l.b16 %v258
    %v472 = vpack.c.b16 %v367, %v360
    %v473 = vpack.c.b16 %v368, %v361
    %v474 = vpack.c.b16 %v369, %v362
    %v475 = vpack.c.b16 %v370, %v363
    %v476 = vpack.c.b16 %v371, %v364
    %v477 = vpack.c.b16 %v372, %v365
    %v478 = vpack.c.b16 %v373, %v366
    %v479 = vpack.c.b16 %v381, %v374
    %v480 = vpack.c.b16 %v382, %v375
    %v481 = vpack.c.b16 %v383, %v376
    %v482 = vpack.c.b16 %v384, %v377
    %v483 = vpack.c.b16 %v385, %v378
    %v484 = vpack.c.b16 %v386, %v379
    %v485 = vpack.c.b16 %v387, %v380
    %v486 = vpack.c.b16 %v395, %v388
    %v487 = vpack.c.b16 %v396, %v389
    %v488 = vpack.c.b16 %v397, %v390
    %v489 = vpack.c.b16 %v398, %v391
    %v490 = vpack.c.b16 %v399, %v392
    %v491 = vpack.c.b16 %v400, %v393
    %v492 = vpack.c.b16 %v401, %v394
    %v493 = vpack.c.b16 %v409, %v402
    %v494 = vpack.c.b16 %v410, %v403
    %v495 = vpack.c.b16 %v411, %v404
    %v496 = vpack.c.b16 %v412, %v405
    %v497 = vpack.c.b16 %v413, %v406
    %v498 = vpack.c.b16 %v414, %v407
    %v499 = vpack.c.b16 %v415, %v408
    %v500 = vpack.c.b16 %v423, %v416
    %v501 = vpack.c.b16 %v424, %v417
    %v502 = vpack.c.b16 %v425, %v418
    %v503 = vpack.c.b16 %v426, %v419
    %v504 = vpack.c.b16 %v427, %v420
    %v505 = vpack.c.b16 %v428, %v421
    %v506 = vpack.c.b16 %v429, %v422
    %v507 = vpack.c.b16 %v437, %v430
    %v508 = vpack.c.b16 %v438, %v431
    %v509 = vpack.c.b16 %v439, %v432
    %v510 = vpack.c.b16 %v440, %v433
    %v511 = vpack.c.b16 %v441, %v434
    %v512 = vpack.c.b16 %v442, %v435
    %v513 = vpack.c.b16 %v443, %v436
    %v514 = vpack.c.b16 %v451, %v444
    %v515 = vpack.c.b16 %v452, %v445
    %v516 = vpack.c.b16 %v453, %v446
    %v517 = vpack.c.b16 %v454, %v447
    %v518 = vpack.c.b16 %v455, %v448
    %v519 = vpack.c.b16 %v456, %v449
    %v520 = vpack.c.b16 %v457, %v450
    %v521 = vpack.c.b16 %v465, %v458
    %v522 = vpack.c.b16 %v466, %v459
    %v523 = vpack.c.b16 %v467, %v460
    %v524 = vpack.c.b16 %v468, %v461
    %v525 = vpack.c.b16 %v469, %v462
    %v526 = vpack.c.b16 %v470, %v463
    %v527 = vpack.c.b16 %v471, %v464
    %584 = vmatprep.subr.bf16.mxu0 %v473
    %585 = vmatpush1.bf16.msra.mxu0 %v472
    %586 = vmatprep.subr.bf16.mxu0 %v480
    %587 = vmatpush1.bf16.msra.mxu0 %v479
    %588 = vmatprep.subr.bf16.mxu0 %v487
    %589 = vmatpush1.bf16.msra.mxu0 %v486
    %590 = vmatprep.subr.bf16.mxu0 %v494
    %591 = vmatpush1.bf16.msra.mxu0 %v493
    %592 = vmatprep.subr.bf16.mxu0 %v501
    %593 = vmatpush1.bf16.msra.mxu0 %v500
    %594 = vmatprep.subr.bf16.mxu0 %v508
    %595 = vmatpush1.bf16.msra.mxu0 %v507
    %596 = vmatprep.subr.bf16.mxu0 %v515
    %597 = vmatpush1.bf16.msra.mxu0 %v514
    %598 = vmatprep.subr.bf16.mxu0 %v522
    %599 = vmatpush1.bf16.msra.mxu0 %v521
    %600 = vmatprep.subr.bf16.mxu0 0
    %601 = vmatpush1.bf16.msra.mxu0 0
    %602 = vmatprep.subr.bf16.mxu0 0
    %603 = vmatpush1.bf16.msra.mxu0 0
    %604 = vmatprep.subr.bf16.mxu0 0
    %605 = vmatpush1.bf16.msra.mxu0 0
    %606 = vmatprep.subr.bf16.mxu0 0
    %607 = vmatpush1.bf16.msra.mxu0 0
    %608 = vmatprep.subr.bf16.mxu0 0
    %609 = vmatpush1.bf16.msra.mxu0 0
    %610 = vmatprep.subr.bf16.mxu0 0
    %611 = vmatpush1.bf16.msra.mxu0 0
    %612 = vmatprep.subr.bf16.mxu0 0
    %613 = vmatpush1.bf16.msra.mxu0 0
    %614 = vmatprep.subr.bf16.mxu0 0
    %615 = vmatpush1.bf16.msra.mxu0 0
    %616 = vmatprep.mubr.bf16.mxu0 0
    %617 = vmatmul.mubr.bf16.gmra.mrb[0].mxu0 %v194
    %v618 = vpop.f32.mrb[0].mxu0
    %v619 = vadd.f32 %v264, %v618
    %v620 = vpop.f32.mrb[0].mxu0
    %v621 = vadd.f32 %v268, %v620
    %v622 = vpop.f32.mrb[0].mxu0
    %v623 = vadd.f32 %v264, %v622
    %v624 = vpop.f32.mrb[0].mxu0
    %v625 = vadd.f32 %v268, %v624
    %626 = vdwg.mxu0
    %627 = vmatprep.subr.bf16.mxu0 %v475
    %628 = vmatpush1.bf16.msra.mxu0 %v474
    %629 = vmatprep.subr.bf16.mxu0 %v482
    %630 = vmatpush1.bf16.msra.mxu0 %v481
    %631 = vmatprep.subr.bf16.mxu0 %v489
    %632 = vmatpush1.bf16.msra.mxu0 %v488
    %633 = vmatprep.subr.bf16.mxu0 %v496
    %634 = vmatpush1.bf16.msra.mxu0 %v495
    %635 = vmatprep.subr.bf16.mxu0 %v503
    %636 = vmatpush1.bf16.msra.mxu0 %v502
    %637 = vmatprep.subr.bf16.mxu0 %v510
    %638 = vmatpush1.bf16.msra.mxu0 %v509
    %639 = vmatprep.subr.bf16.mxu0 %v517
    %640 = vmatpush1.bf16.msra.mxu0 %v516
    %641 = vmatprep.subr.bf16.mxu0 %v524
    %642 = vmatpush1.bf16.msra.mxu0 %v523
    %643 = vmatprep.subr.bf16.mxu0 0
    %644 = vmatpush1.bf16.msra.mxu0 0
    %645 = vmatprep.subr.bf16.mxu0 0
    %646 = vmatpush1.bf16.msra.mxu0 0
    %647 = vmatprep.subr.bf16.mxu0 0
    %648 = vmatpush1.bf16.msra.mxu0 0
    %649 = vmatprep.subr.bf16.mxu0 0
    %650 = vmatpush1.bf16.msra.mxu0 0
    %651 = vmatprep.subr.bf16.mxu0 0
    %652 = vmatpush1.bf16.msra.mxu0 0
    %653 = vmatprep.subr.bf16.mxu0 0
    %654 = vmatpush1.bf16.msra.mxu0 0
    %655 = vmatprep.subr.bf16.mxu0 0
    %656 = vmatpush1.bf16.msra.mxu0 0
    %657 = vmatprep.subr.bf16.mxu0 0
    %658 = vmatpush1.bf16.msra.mxu0 0
    %659 = vmatprep.mubr.bf16.mxu0 0
    %660 = vmatmul.mubr.bf16.gmra.mrb[0].mxu0 %v194
    %v661 = vpop.f32.mrb[0].mxu0
    %v662 = vadd.f32 %v272, %v661
    %v663 = vpop.f32.mrb[0].mxu0
    %v664 = vadd.f32 %v276, %v663
    %v665 = vpop.f32.mrb[0].mxu0
    %v666 = vadd.f32 %v272, %v665
    %v667 = vpop.f32.mrb[0].mxu0
    %v668 = vadd.f32 %v276, %v667
    %669 = vdwg.mxu0
    %670 = vmatprep.subr.bf16.mxu0 %v477
    %671 = vmatpush1.bf16.msra.mxu0 %v476
    %672 = vmatprep.subr.bf16.mxu0 %v484
    %673 = vmatpush1.bf16.msra.mxu0 %v483
    %674 = vmatprep.subr.bf16.mxu0 %v491
    %675 = vmatpush1.bf16.msra.mxu0 %v490
    %676 = vmatprep.subr.bf16.mxu0 %v498
    %677 = vmatpush1.bf16.msra.mxu0 %v497
    %678 = vmatprep.subr.bf16.mxu0 %v505
    %679 = vmatpush1.bf16.msra.mxu0 %v504
    %680 = vmatprep.subr.bf16.mxu0 %v512
    %681 = vmatpush1.bf16.msra.mxu0 %v511
    %682 = vmatprep.subr.bf16.mxu0 %v519
    %683 = vmatpush1.bf16.msra.mxu0 %v518
    %684 = vmatprep.subr.bf16.mxu0 %v526
    %685 = vmatpush1.bf16.msra.mxu0 %v525
    %686 = vmatprep.subr.bf16.mxu0 0
    %687 = vmatpush1.bf16.msra.mxu0 0
    %688 = vmatprep.subr.bf16.mxu0 0
    %689 = vmatpush1.bf16.msra.mxu0 0
    %690 = vmatprep.subr.bf16.mxu0 0
    %691 = vmatpush1.bf16.msra.mxu0 0
    %692 = vmatprep.subr.bf16.mxu0 0
    %693 = vmatpush1.bf16.msra.mxu0 0
    %694 = vmatprep.subr.bf16.mxu0 0
    %695 = vmatpush1.bf16.msra.mxu0 0
    %696 = vmatprep.subr.bf16.mxu0 0
    %697 = vmatpush1.bf16.msra.mxu0 0
    %698 = vmatprep.subr.bf16.mxu0 0
    %699 = vmatpush1.bf16.msra.mxu0 0
    %700 = vmatprep.subr.bf16.mxu0 0
    %701 = vmatpush1.bf16.msra.mxu0 0
    %702 = vmatprep.mubr.bf16.mxu0 0
    %703 = vmatmul.mubr.bf16.gmra.mrb[0].mxu0 %v194
    %v704 = vpop.f32.mrb[0].mxu0
    %v705 = vadd.f32 %v280, %v704
    %v706 = vpop.f32.mrb[0].mxu0
    %v707 = vadd.f32 %v284, %v706
    %v708 = vpop.f32.mrb[0].mxu0
    %v709 = vadd.f32 %v280, %v708
    %v710 = vpop.f32.mrb[0].mxu0
    %v711 = vadd.f32 %v284, %v710
    %712 = vdwg.mxu0
    %713 = vmatprep.subr.bf16.mxu0 0
    %714 = vmatpush1.bf16.msra.mxu0 %v478
    %715 = vmatprep.subr.bf16.mxu0 0
    %716 = vmatpush1.bf16.msra.mxu0 %v485
    %717 = vmatprep.subr.bf16.mxu0 0
    %718 = vmatpush1.bf16.msra.mxu0 %v492
    %719 = vmatprep.subr.bf16.mxu0 0
    %720 = vmatpush1.bf16.msra.mxu0 %v499
    %721 = vmatprep.subr.bf16.mxu0 0
    %722 = vmatpush1.bf16.msra.mxu0 %v506
    %723 = vmatprep.subr.bf16.mxu0 0
    %724 = vmatpush1.bf16.msra.mxu0 %v513
    %725 = vmatprep.subr.bf16.mxu0 0
    %726 = vmatpush1.bf16.msra.mxu0 %v520
    %727 = vmatprep.subr.bf16.mxu0 0
    %728 = vmatpush1.bf16.msra.mxu0 %v527
    %729 = vmatprep.subr.bf16.mxu0 0
    %730 = vmatpush1.bf16.msra.mxu0 0
    %731 = vmatprep.subr.bf16.mxu0 0
    %732 = vmatpush1.bf16.msra.mxu0 0
    %733 = vmatprep.subr.bf16.mxu0 0
    %734 = vmatpush1.bf16.msra.mxu0 0
    %735 = vmatprep.subr.bf16.mxu0 0
    %736 = vmatpush1.bf16.msra.mxu0 0
    %737 = vmatprep.subr.bf16.mxu0 0
    %738 = vmatpush1.bf16.msra.mxu0 0
    %739 = vmatprep.subr.bf16.mxu0 0
    %740 = vmatpush1.bf16.msra.mxu0 0
    %741 = vmatprep.subr.bf16.mxu0 0
    %742 = vmatpush1.bf16.msra.mxu0 0
    %743 = vmatprep.subr.bf16.mxu0 0
    %744 = vmatpush1.bf16.msra.mxu0 0
    %745 = vmatprep.mubr.bf16.mxu0 0
    %746 = vmatmul.mubr.bf16.gmra.mrb[0].mxu0 %v194
    %v747 = vpop.f32.mrb[0].mxu0
    %v748 = vadd.f32 %v288, %v747
    %v749 = vpop.f32.mrb[0].mxu0
    %v750 = vpop.f32.mrb[0].mxu0
    %v751 = vadd.f32 %v288, %v750
    %v752 = vpop.f32.mrb[0].mxu0
    %753 = vdwg.mxu0
    %v754 = vpack.c.bf16 %v623, %v619
    %v755 = vpack.c.bf16 %v625, %v621
    %v756 = vpack.c.bf16 %v666, %v662
    %v757 = vpack.c.bf16 %v668, %v664
    %v758 = vpack.c.bf16 %v709, %v705
    %v759 = vpack.c.bf16 %v711, %v707
    %v760 = vpack.c.bf16 %v751, %v748
    %v761 = vmul.bf16 %v754, 1056980736
    %v762 = vmul.bf16 %v755, 1056980736
    %v763 = vmul.bf16 %v756, 1056980736
    %v764 = vmul.bf16 %v757, 1056980736
    %v765 = vmul.bf16 %v758, 1056980736
    %v766 = vmul.bf16 %v759, 1056980736
    %v767 = vmul.bf16 %v760, 1056980736
    %v768 = vtanh.bf16.pop %v761
    %v769 = vtanh.bf16.pop %v762
    %v770 = vtanh.bf16.pop %v763
    %v771 = vtanh.bf16.pop %v764
    %v772 = vtanh.bf16.pop %v765
    %v773 = vtanh.bf16.pop %v766
    %v774 = vtanh.bf16.pop %v767
    %v775 = vadd.bf16 %v768, 1065369472
    %v776 = vadd.bf16 %v769, 1065369472
    %v777 = vadd.bf16 %v770, 1065369472
    %v778 = vadd.bf16 %v771, 1065369472
    %v779 = vadd.bf16 %v772, 1065369472
    %v780 = vadd.bf16 %v773, 1065369472
    %v781 = vadd.bf16 %v774, 1065369472
    %v782 = vmul.bf16 %v775, 1056980736
    %v783 = vmul.bf16 %v776, 1056980736
    %v784 = vmul.bf16 %v777, 1056980736
    %v785 = vmul.bf16 %v778, 1056980736
    %v786 = vmul.bf16 %v779, 1056980736
    %v787 = vmul.bf16 %v780, 1056980736
    %v788 = vmul.bf16 %v781, 1056980736
    %v796 = vunpack.c.l.b16 %v782
    %v797 = vunpack.c.l.b16 %v783
    %v798 = vunpack.c.l.b16 %v784
    %v799 = vunpack.c.l.b16 %v785
    %v800 = vunpack.c.l.b16 %v786
    %v801 = vunpack.c.l.b16 %v787
    %v802 = vunpack.c.l.b16 %v788
    %v803 = vunpack.c.h.b16 %v782
    %v804 = vunpack.c.h.b16 %v783
    %v805 = vunpack.c.h.b16 %v784
    %v806 = vunpack.c.h.b16 %v785
    %v807 = vunpack.c.h.b16 %v786
    %v808 = vunpack.c.h.b16 %v787
    %v809 = vunpack.c.h.b16 %v788
    %v810 = vpack.c.b16 %v797, %v796
    %v811 = vpack.c.b16 %v799, %v798
    %v812 = vpack.c.b16 %v801, %v800
    %v813 = vpack.c.b16 %v802, %v802
    %v814 = vpack.c.b16 %v804, %v803
    %v815 = vpack.c.b16 %v806, %v805
    %v816 = vpack.c.b16 %v808, %v807
    %v817 = vpack.c.b16 %v809, %v809
    %826 = vst [vmem:[#allocation2] sm:$0xff] %v810
    %827 = vst [vmem:[#allocation2 + $0x8] sm:$0xff] %v811
    %828 = vst [vmem:[#allocation2 + $0x10] sm:$0xff] %v812
    %vm829 = vcmask 125952
    %830 = vst.msk [vmem:[#allocation2 + $0x18] sm:$0xf] %vm829, %v813
    %831 = vst [vmem:[#allocation2 + $0x1c] sm:$0xff] %v814
    %832 = vst [vmem:[#allocation2 + $0x24] sm:$0xff] %v815
    %833 = vst [vmem:[#allocation2 + $0x2c] sm:$0xff] %v816
    %834 = vst.msk [vmem:[#allocation2 + $0x34] sm:$0xf] %vm829, %v817
    // Predicated region
    $region30: #{tpu_custom_call.1} parent=1 // pred_check
      _
    $region31: #{tpu_custom_call.1} parent=1 // pred_check_branch
      %836 = sbr.rel (0) target = $region33
    $region32: #{tpu_custom_call.1} parent=1 // pred_region
      %s838 = ssub.s32 896, 896
      %839 = vsyncadd [#allocation3], %s838
      %s840 = sshll.u32 [#allocation2], 4
      %s841 = int_to_ptr.vmem [resolvable:$true] %s840
      %846 = dma.vmem_to_hbm [thread:$0]  %s841, 896, %s7, [#allocation3], 448, 448, 28
    $region33: #{tpu_custom_call.1} parent=1 // pred_fallthru
      _
    // Predicated region
    $region34: #{tpu_custom_call.1} parent=1 // pred_check
      _
    $region35: #{tpu_custom_call.1} parent=1 // pred_check_branch
      %848 = sbr.rel (0) target = $region37
    $region36: #{tpu_custom_call.1} parent=1 // pred_region
      %849 = dma.done [#allocation3], 896
    $region37: #{tpu_custom_call.1} parent=1 // pred_fallthru
      _
    %850 = vsyncpa [#allocation3], 1

</llo_original>
